<compile_context>
chip_gen: v7x
topology: tpu7x:2x2x1
jax: 0.10.0
libtpu: 0.0.40
codegen_flags: <defaults>
</compile_context>

<pallas_src>
import jax
import jax.numpy as jnp
from jax.experimental import pallas as pl
from jax.experimental.pallas import tpu as pltpu

_LANES = 128
_FASTPATH_MAX_BYTES = 64 << 10    # tiny params: plain jnp.abs (XLA fuses into consumer)
_GRIDLESS_MAX_BYTES = 2 << 20     # <= 2 MiB: whole array resident in VMEM, no pipelining
_TARGET_BLOCK_BYTES = 4 << 20     # tiled path: ~4 MiB blocks (good for v6e/v7x roofline)
_TILED_VMEM_LIMIT = 32 << 20      # explicit scoped-VMEM limit, safe on v5e/v6e/v7x


def _abs_kernel(coef_ref, out_ref):
    # Single elementwise |x| on the VPU; the op is trivially HBM-bound.
    out_ref[...] = jnp.abs(coef_ref[...])


def _abs_whole(coef: jax.Array, *, vmem_limit_bytes=None) -> jax.Array:
    """Gridless path: whole coefficient array resident in VMEM, zero grid overhead.

    Whole-array blocks are exempt from the (8,128) divisibility rule, so any
    rank/shape is accepted directly (no pad / reshape / slice repack).
    """
    params = (pltpu.CompilerParams(vmem_limit_bytes=int(vmem_limit_bytes))
              if vmem_limit_bytes is not None else None)
    return pl.pallas_call(
        _abs_kernel,
        out_shape=jax.ShapeDtypeStruct(coef.shape, coef.dtype),
        in_specs=[pl.BlockSpec(memory_space=pltpu.MemorySpace.VMEM)],
        out_specs=pl.BlockSpec(memory_space=pltpu.MemorySpace.VMEM),
        compiler_params=params,
    )(coef)


def _abs_tiled_2d(x: jax.Array) -> jax.Array:
    """Scale-safe path for large 2-D coef slabs: ~4 MiB blocks, megacore-parallel."""
    R, C = x.shape
    item = int(x.dtype.itemsize)

    # Column tile: full C if eight rows of it fit the block budget, otherwise a
    # 128-lane multiple chunk (keeps stores full-width vst; v5e-safe for huge C).
    if 8 * C * item <= _TARGET_BLOCK_BYTES:
        tile_c = C
    else:
        tile_c = max(_LANES, (_TARGET_BLOCK_BYTES // (8 * item) // _LANES) * _LANES)

    # Row tile: fill the ~4 MiB block budget; multiple of 8 sublanes.
    tile_r = max(8, (_TARGET_BLOCK_BYTES // (tile_c * item)) // 8 * 8)

    # Keep >= 2 grid steps so the 'parallel' axes shard across v7x's 2 TensorCores.
    if tile_c == C and tile_r >= R and R > 8:
        tile_r = (((R + 1) // 2 + 7) // 8) * 8
    tile_r = int(min(tile_r, R))
    tile_c = int(tile_c)

    grid = (pl.cdiv(R, tile_r), pl.cdiv(C, tile_c))
    return pl.pallas_call(
        _abs_kernel,
        out_shape=jax.ShapeDtypeStruct((R, C), x.dtype),
        grid=grid,
        in_specs=[pl.BlockSpec((tile_r, tile_c), lambda i, j: (i, j))],
        out_specs=pl.BlockSpec((tile_r, tile_c), lambda i, j: (i, j)),
        compiler_params=pltpu.CompilerParams(
            dimension_semantics=("parallel", "parallel"),
            vmem_limit_bytes=_TILED_VMEM_LIMIT,
        ),
    )(x)


def coef_model_forward(coef: jax.Array, *, force_pallas: bool = False) -> jax.Array:
    """Pallas equivalent of coefModel.forward(): returns |coef| as float32."""
    coef = jnp.asarray(coef)
    if coef.dtype != jnp.float32:
        coef = coef.astype(jnp.float32)

    nbytes = coef.size * coef.dtype.itemsize
    if coef.ndim == 0 or (not force_pallas and nbytes <= _FASTPATH_MAX_BYTES):
        # Realistic coefModel case: the parameter is tiny.  A custom-call launch
        # plus HBM round trip costs microseconds vs. nanoseconds of work; let
        # XLA fuse the abs into whatever consumes the coefficients.
        return jnp.abs(coef)

    if nbytes <= _GRIDLESS_MAX_BYTES:
        return _abs_whole(coef)

    # Large slab: pipelined, megacore-parallel tiled path.
    if coef.ndim == 2:
        return _abs_tiled_2d(coef)
    n = coef.size
    if n % _LANES == 0:
        # Collapsing a contiguous array to (n/128, 128) is layout-preserving
        # (no extra HBM pass), unlike the old pad/slice repack.
        return _abs_tiled_2d(coef.reshape(n // _LANES, _LANES)).reshape(coef.shape)
    # TODO(synk): a huge (>2 MiB) AND non-lane-dense coef is unrealistic for
    # coefModel; fall back to the gridless path with an explicit VMEM limit.
    return _abs_whole(coef, vmem_limit_bytes=_TILED_VMEM_LIMIT)


if __name__ == "__main__":
    # The nn.Parameter `coef_initial`: (8, 128) float32 in [-1, 1).
    coef_initial = jax.random.uniform(
        jax.random.PRNGKey(0), (8, 128), dtype=jnp.float32, minval=-1.0, maxval=1.0)
    ref = jnp.abs(coef_initial)

    # 1) Default dispatch: tiny parameter -> fused jnp.abs fast path.
    out_fast = jax.block_until_ready(coef_model_forward(coef_initial))
    assert out_fast.shape == coef_initial.shape and out_fast.dtype == jnp.float32
    assert bool(jnp.allclose(out_fast, ref)), "fast-path mismatch"

    # 2) Force the gridless Pallas kernel (whole array resident in VMEM).
    out_pallas = jax.block_until_ready(
        coef_model_forward(coef_initial, force_pallas=True))
    assert out_pallas.shape == coef_initial.shape and out_pallas.dtype == jnp.float32
    assert bool(jnp.allclose(out_pallas, ref)), "gridless Pallas mismatch"

    # 3) Ragged / non-lane-dense shapes pass through unmodified (no pad/repack).
    keys = jax.random.split(jax.random.PRNGKey(0), 3)
    coef_1d = jax.random.uniform(keys[0], (300,), dtype=jnp.float32,
                                 minval=-1.0, maxval=1.0)
    out_1d = jax.block_until_ready(coef_model_forward(coef_1d, force_pallas=True))
    assert out_1d.shape == coef_1d.shape and out_1d.dtype == jnp.float32
    assert bool(jnp.allclose(out_1d, jnp.abs(coef_1d))), "1-D Pallas mismatch"

    coef_2d_ragged = jax.random.uniform(keys[1], (17, 50), dtype=jnp.float32,
                                        minval=-1.0, maxval=1.0)
    out_r = jax.block_until_ready(
        coef_model_forward(coef_2d_ragged, force_pallas=True))
    assert bool(jnp.allclose(out_r, jnp.abs(coef_2d_ragged))), "ragged 2-D mismatch"

    # 4) Smoke-test the tiled megacore path directly on a modest 1 MiB slab.
    coef_big = jax.random.uniform(keys[2], (1024, 256), dtype=jnp.float32,
                                  minval=-1.0, maxval=1.0)
    out_big = jax.block_until_ready(_abs_tiled_2d(coef_big))
    assert bool(jnp.allclose(out_big, jnp.abs(coef_big))), "tiled-path mismatch"

    print("KERNEL_OK")
</pallas_src>

<mosaic_0001>
module attributes {stable_mosaic.version = 11 : i64} {
  func.func @_abs_kernel(%arg0: memref<8x128xf32, #tpu.memory_space<vmem>>, %arg1: memref<8x128xf32, #tpu.memory_space<vmem>>) attributes {dimension_semantics = [], scalar_prefetch = 0 : i64, scratch_operands = 0 : i64, tpu.core_type = #tpu.core_type<tc>} {
    %c0 = arith.constant 0 : index
    %c0_0 = arith.constant 0 : index
    %0 = vector.load %arg0[%c0, %c0_0] : memref<8x128xf32, #tpu.memory_space<vmem>>, vector<8x128xf32>
    %1 = math.absf %0 : vector<8x128xf32>
    %c0_1 = arith.constant 0 : index
    %c0_2 = arith.constant 0 : index
    %2 = vector.load %arg1[%c0_1, %c0_2] : memref<8x128xf32, #tpu.memory_space<vmem>>, vector<8x128xf32>
    tpu.vector_store %arg1[%c0_1, %c0_2], %1 {strides = array<i32>} : memref<8x128xf32, #tpu.memory_space<vmem>>, vector<8x128xf32>,
    return
  }
}

</mosaic_0001>

<llo_original>
// kernel: tpu_custom_call.1
$region0: #{tpu_custom_call.1}
  #allocation0 [shape = 'u32[]', space=smem, size = 0x4, offset = 0x4, fixed_abs, tag = 'smem constant byte address 0x4 - core index']
  #allocation1 [shape = 'u32[144,128]{1,0:T(1,128)}', space=vmem, size = 0x12000, scoped, tag = 'internal scratch']
  %s0 = inlined_call_operand.hbm [shape: f32[8,128], index: 0, kind: input, shape index: {}]
  %s1 = inlined_call_operand.hbm [shape: f32[8,128], index: 1, kind: output, shape index: {}]
  %s2 = sld [smem:[#allocation0]]
  $region18: #{tpu_custom_call.1} parent=0
    _
  %s4 = ssub.s32 1, %s2
  %s5 = scalar_select 0, %s4, %s2
  $region1: #{tpu_custom_call.1} parent=0
    #allocation2 [shape = 'u8[4096]{0}', space=vmem, size = 0x1000, scoped, tag = 'input window, operand 0, single buffered']
    #allocation3 [shape = 's32[1]{0}', space=sflag, size = 0x4, scoped, tag = 'scoped memory for tpu_custom_call.1']
    #allocation4 [shape = 's32[1]{0}', space=sflag, size = 0x4, scoped, tag = 'scoped memory for tpu_custom_call.1']
    #allocation5 [shape = 'u8[4096]{0}', space=vmem, size = 0x1000, scoped, tag = 'output window, operand 0, single buffered']
    %6 = vsyncpa [#allocation3], 0
    %7 = vsyncpa [#allocation4], 0
    // Predicated region
    $region2: #{tpu_custom_call.1} parent=1 // pred_check
      _
    $region3: #{tpu_custom_call.1} parent=1 // pred_check_branch
      %9 = sbr.rel (0) target = $region5
    $region4: #{tpu_custom_call.1} parent=1 // pred_region
      %s11 = ssub.s32 128, 128
      %12 = vsyncadd [#allocation3], %s11
      %s14 = sshll.u32 [#allocation2], 4
      %s15 = int_to_ptr.vmem [resolvable:$true] %s14
      %17 = dma.hbm_to_vmem [thread:$0]  %s0, 128, %s15, [#allocation3]
    $region5: #{tpu_custom_call.1} parent=1 // pred_fallthru
      _
    // Predicated region
    $region6: #{tpu_custom_call.1} parent=1 // pred_check
      _
    $region7: #{tpu_custom_call.1} parent=1 // pred_check_branch
      %19 = sbr.rel (0) target = $region9
    $region8: #{tpu_custom_call.1} parent=1 // pred_region
      %20 = dma.done [#allocation3], 128
    $region9: #{tpu_custom_call.1} parent=1 // pred_fallthru
      _
    %v21 = vld [vmem:[#allocation2] sm:$0xff]
    %v22 = vand.u32 2147483647, %v21
    %23 = vst [vmem:[#allocation5] sm:$0xff] %v22
    // Predicated region
    $region10: #{tpu_custom_call.1} parent=1 // pred_check
      _
    $region11: #{tpu_custom_call.1} parent=1 // pred_check_branch
      %25 = sbr.rel (0) target = $region13
    $region12: #{tpu_custom_call.1} parent=1 // pred_region
      %s27 = ssub.s32 128, 128
      %28 = vsyncadd [#allocation4], %s27
      %s30 = sshll.u32 [#allocation5], 4
      %s31 = int_to_ptr.vmem [resolvable:$true] %s30
      %33 = dma.vmem_to_hbm [thread:$0]  %s31, 128, %s1, [#allocation4]
    $region13: #{tpu_custom_call.1} parent=1 // pred_fallthru
      _
    // Predicated region
    $region14: #{tpu_custom_call.1} parent=1 // pred_check
      _
    $region15: #{tpu_custom_call.1} parent=1 // pred_check_branch
      %35 = sbr.rel (0) target = $region17
    $region16: #{tpu_custom_call.1} parent=1 // pred_region
      %36 = dma.done [#allocation4], 128
    $region17: #{tpu_custom_call.1} parent=1 // pred_fallthru
      _
    %37 = vsyncpa [#allocation3], 1
    %38 = vsyncpa [#allocation4], 1

</llo_original>
